<compile_context>
chip_gen: v7x
topology: tpu7x:2x2x1
jax: 0.10.0
libtpu: 0.0.40
codegen_flags: <defaults>
</compile_context>

<pallas_src>
import math
import jax
import jax.numpy as jnp
from jax.experimental import pallas as pl
from jax.experimental.pallas import tpu as pltpu


# ---------------------------------------------------------------------------
# helpers
# ---------------------------------------------------------------------------
def _round_up(x, m):
    return ((x + m - 1) // m) * m


def _pick_tile(target, limit, grain):
    """Largest multiple of `grain` that divides `limit` and is <= min(target, limit)."""
    t = min(target, limit)
    t = max((t // grain) * grain, grain)
    while t > grain and limit % t != 0:
        t -= grain
    return t


# ---------------------------------------------------------------------------
# fused kernel:  out[i-tile] = sum_k adj[i-tile, k-tile] @ (x[k-tile] @ W)  (+ bias)
# ---------------------------------------------------------------------------
def _gcn_kernel_bias(adj_ref, x_ref, w_ref, b_ref, o_ref, acc_ref):
    k = pl.program_id(1)
    # support slab for this k-tile of nodes, f32 accumulation on the MXU.
    support = jnp.dot(x_ref[...], w_ref[...], preferred_element_type=jnp.float32)
    partial = jnp.dot(adj_ref[...], support, preferred_element_type=jnp.float32)

    @pl.when(k == 0)
    def _():
        acc_ref[...] = partial          # first partial written directly (no zero-fill)

    @pl.when(k > 0)
    def _():
        acc_ref[...] += partial

    @pl.when(k == pl.num_programs(1) - 1)
    def _():
        o_ref[...] = (acc_ref[...] + b_ref[...]).astype(o_ref.dtype)


def _gcn_kernel_nobias(adj_ref, x_ref, w_ref, o_ref, acc_ref):
    k = pl.program_id(1)
    support = jnp.dot(x_ref[...], w_ref[...], preferred_element_type=jnp.float32)
    partial = jnp.dot(adj_ref[...], support, preferred_element_type=jnp.float32)

    @pl.when(k == 0)
    def _():
        acc_ref[...] = partial

    @pl.when(k > 0)
    def _():
        acc_ref[...] += partial

    @pl.when(k == pl.num_programs(1) - 1)
    def _():
        o_ref[...] = acc_ref[...].astype(o_ref.dtype)


# ---------------------------------------------------------------------------
# wrapper
# ---------------------------------------------------------------------------
def graph_convolution(x, adj, weight, bias=None, *,
                      tm_target=512, tk_target=2048, vmem_limit_bytes=None):
    """Pallas GCN forward: adj @ (x @ weight) (+ bias).

    x: [N, F_in], adj: [N, N], weight: [F_in, F_out], bias: [F_out] or None.
    No dtype casts are performed on adj/x — they are streamed as given
    (pre-cast adj to bf16 once per model if a bf16 feed is desired).
    """
    N, f_in = x.shape
    f_in_w, f_out = weight.shape
    assert f_in_w == f_in, "weight first dim must match x feature dim"
    assert adj.shape == (N, N), "adj must be [N, N]"

    out_dtype = jnp.result_type(x.dtype, weight.dtype)

    # --- lane-dense output: pad f_out to a multiple of 128 (layout plumbing) ---
    f_out_p = _round_up(f_out, 128)
    weight_p = weight if f_out_p == f_out else jnp.pad(weight, ((0, 0), (0, f_out_p - f_out)))
    if bias is not None:
        b = bias.astype(jnp.float32)
        if f_out_p != f_out:
            b = jnp.pad(b, (0, f_out_p - f_out))
        bias2d = b.reshape(1, f_out_p)

    # --- pad node count to a 128 multiple; pick tiles that divide it exactly ---
    n_p = _round_up(N, 128)
    tm = _pick_tile(tm_target, n_p, 8)      # output-row tile (sublane dim of adj)
    tk = _pick_tile(tk_target, n_p, 128)    # contraction tile (lane dim of adj)
    if n_p != N:
        pad_n = n_p - N
        x_p = jnp.pad(x, ((0, pad_n), (0, 0)))
        adj_p = jnp.pad(adj, ((0, pad_n), (0, pad_n)))
    else:
        x_p, adj_p = x, adj

    grid = (n_p // tm, n_p // tk)

    adj_isz = jnp.dtype(adj_p.dtype).itemsize
    x_isz = jnp.dtype(x_p.dtype).itemsize
    w_isz = jnp.dtype(weight_p.dtype).itemsize
    o_isz = jnp.dtype(out_dtype).itemsize

    # --- VMEM footprint: double-buffered adj/x/out tiles + resident W/bias + acc ---
    need = (2 * tm * tk * adj_isz
            + 2 * tk * f_in * x_isz
            + 2 * f_in * f_out_p * w_isz
            + (2 * f_out_p * 4 if bias is not None else 0)
            + 2 * tm * f_out_p * o_isz
            + tm * f_out_p * 4)
    if vmem_limit_bytes is None:
        # >= 32 MiB scoped default, capped under the v7x 64 MiB/TC physical VMEM.
        # On v5e/v6e (128 MiB physical) callers may pass a larger limit + tiles.
        vmem_limit_bytes = min(max(32 * 1024 * 1024, int(need * 1.5) + (4 << 20)),
                               56 * 1024 * 1024)

    # --- honest cost estimate (includes per-row-tile support recompute + x re-reads) ---
    rsteps = n_p // tm
    flops = 2 * n_p * n_p * f_out_p + 2 * rsteps * n_p * f_in * f_out_p
    bytes_accessed = int(n_p * n_p * adj_isz
                         + rsteps * n_p * f_in * x_isz
                         + f_in * f_out_p * w_isz
                         + n_p * f_out_p * o_isz
                         + (f_out_p * 4 if bias is not None else 0))

    in_specs = [
        pl.BlockSpec((tm, tk), lambda i, k: (i, k)),         # adj tile (streamed)
        pl.BlockSpec((tk, f_in), lambda i, k: (k, 0)),       # x k-slab
        pl.BlockSpec((f_in, f_out_p), lambda i, k: (0, 0)),  # W (VMEM resident)
    ]
    operands = [adj_p, x_p, weight_p]
    if bias is not None:
        in_specs.append(pl.BlockSpec((1, f_out_p), lambda i, k: (0, 0)))  # bias (resident)
        operands.append(bias2d)
        kernel = _gcn_kernel_bias
    else:
        kernel = _gcn_kernel_nobias

    out_p = pl.pallas_call(
        kernel,
        out_shape=jax.ShapeDtypeStruct((n_p, f_out_p), out_dtype),
        grid_spec=pltpu.PrefetchScalarGridSpec(
            num_scalar_prefetch=0,
            grid=grid,
            in_specs=in_specs,
            out_specs=pl.BlockSpec((tm, f_out_p), lambda i, k: (i, 0)),
            scratch_shapes=[pltpu.VMEM((tm, f_out_p), jnp.float32)],
        ),
        compiler_params=pltpu.CompilerParams(
            # Row tiles are independent -> 'parallel' (sharded across the 2 TCs
            # on v7x); contraction axis carries the accumulator -> 'arbitrary'.
            dimension_semantics=("parallel", "arbitrary"),
            vmem_limit_bytes=vmem_limit_bytes,
        ),
        cost_estimate=pl.CostEstimate(
            flops=flops, transcendentals=0, bytes_accessed=bytes_accessed
        ),
    )(*operands)

    if n_p != N or f_out_p != f_out:
        out_p = out_p[:N, :f_out]
    return out_p


# ---------------------------------------------------------------------------
# self-test
# ---------------------------------------------------------------------------
def _make_problem(key, n, f_in, f_out, with_bias=True):
    kx, kadj, kw, kb = jax.random.split(key, 4)
    # reset_parameters(): uniform(-stdv, stdv), stdv = 1 / sqrt(out_features).
    stdv = 1.0 / math.sqrt(f_out)
    weight = jax.random.uniform(kw, (f_in, f_out), minval=-stdv, maxval=stdv,
                                dtype=jnp.float32)
    bias = None
    if with_bias:
        bias = jax.random.uniform(kb, (f_out,), minval=-stdv, maxval=stdv,
                                  dtype=jnp.float32)
    x = jax.random.normal(kx, (n, f_in), dtype=jnp.float32)
    # synthetic degree-normalized dense adjacency
    a = (jax.random.uniform(kadj, (n, n)) < 0.05).astype(jnp.float32)
    a = a + a.T + jnp.eye(n, dtype=jnp.float32)
    deg = jnp.clip(a.sum(axis=1, keepdims=True), 1.0, None)
    adj = a / deg
    return x, adj, weight, bias


if __name__ == "__main__":
    key = jax.random.PRNGKey(0)
    k1, k2 = jax.random.split(key)

    # 1) Aligned problem, bias, default (large) tiles -> single grid step here.
    N, F_IN, F_OUT = 256, 64, 128
    x, adj, weight, bias = _make_problem(k1, N, F_IN, F_OUT, with_bias=True)
    ref = adj @ (x @ weight) + bias

    out = jax.block_until_ready(graph_convolution(x, adj, weight, bias))
    assert out.shape == (N, F_OUT)
    assert jnp.allclose(out, ref, atol=1e-3, rtol=1e-3), "default-tile mismatch"

    # 2) Same problem, small tiles -> exercises multi-step K accumulation +
    #    row-parallel grid + bias finalize on the last K step.
    out_t = jax.block_until_ready(
        graph_convolution(x, adj, weight, bias, tm_target=128, tk_target=128))
    assert jnp.allclose(out_t, ref, atol=1e-3, rtol=1e-3), "tiled mismatch"

    # 3) Ragged N / narrow f_out, no bias -> exercises N padding, f_out lane
    #    padding, and the bias-free kernel specialization.
    N2, F_IN2, F_OUT2 = 200, 48, 72
    x2, adj2, weight2, _ = _make_problem(k2, N2, F_IN2, F_OUT2, with_bias=False)
    ref2 = adj2 @ (x2 @ weight2)
    out2 = jax.block_until_ready(graph_convolution(x2, adj2, weight2, None))
    assert out2.shape == (N2, F_OUT2)
    assert jnp.allclose(out2, ref2, atol=1e-3, rtol=1e-3), "ragged/no-bias mismatch"

    print("KERNEL_OK")
</pallas_src>

<mosaic_0001>
module attributes {stable_mosaic.version = 11 : i64} {
  func.func @_gcn_kernel_bias(%arg0: i32, %arg1: i32, %arg2: memref<256x256xf32, #tpu.memory_space<vmem>>, %arg3: memref<256x64xf32, #tpu.memory_space<vmem>>, %arg4: memref<64x128xf32, #tpu.memory_space<vmem>>, %arg5: memref<1x128xf32, #tpu.memory_space<vmem>>, %arg6: memref<256x128xf32, #tpu.memory_space<vmem>>, %arg7: memref<256x128xf32, #tpu.memory_space<vmem>>) attributes {dimension_semantics = [#tpu.dimension_semantics<parallel>, #tpu.dimension_semantics<arbitrary>], iteration_bounds = array<i64: 1, 1>, scalar_prefetch = 0 : i64, scratch_operands = 1 : i64, tpu.core_type = #tpu.core_type<tc>, window_params = [{transform_indices = @transform_0, window_bounds = array<i64: 256, 256>}, {transform_indices = @transform_1, window_bounds = array<i64: 256, 64>}, {pipeline_mode = #tpu.pipeline_mode<synchronous>, transform_indices = @transform_2, window_bounds = array<i64: 64, 128>}, {pipeline_mode = #tpu.pipeline_mode<synchronous>, transform_indices = @transform_3, window_bounds = array<i64: 1, 128>}, {transform_indices = @transform_4, window_bounds = array<i64: 256, 128>}]} {
    %c0 = arith.constant 0 : index
    %c0_0 = arith.constant 0 : index
    %0 = vector.load %arg3[%c0, %c0_0] : memref<256x64xf32, #tpu.memory_space<vmem>>, vector<256x64xf32>
    %c0_1 = arith.constant 0 : index
    %c0_2 = arith.constant 0 : index
    %1 = vector.load %arg4[%c0_1, %c0_2] : memref<64x128xf32, #tpu.memory_space<vmem>>, vector<64x128xf32>
    %cst = arith.constant dense<0.000000e+00> : vector<256x128xf32>
    %2 = tpu.matmul %0, %1, %cst {dimension_numbers = #tpu.dot_dimension_numbers<[1], [0], [0], [1], [0, 0, 1, 1], [], []>} : vector<256x64xf32>, vector<64x128xf32>, vector<256x128xf32> -> vector<256x128xf32>
    %c0_3 = arith.constant 0 : index
    %c0_4 = arith.constant 0 : index
    %3 = vector.load %arg2[%c0_3, %c0_4] : memref<256x256xf32, #tpu.memory_space<vmem>>, vector<256x256xf32>
    %cst_5 = arith.constant dense<0.000000e+00> : vector<256x128xf32>
    %4 = tpu.matmul %3, %2, %cst_5 {dimension_numbers = #tpu.dot_dimension_numbers<[1], [0], [0], [1], [0, 0, 1, 1], [], []>} : vector<256x256xf32>, vector<256x128xf32>, vector<256x128xf32> -> vector<256x128xf32>
    %c0_i32 = arith.constant 0 : i32
    %5 = arith.cmpi eq, %arg1, %c0_i32 : i32
    %6 = arith.extui %5 : i1 to i32
    %c0_i32_6 = arith.constant 0 : i32
    %7 = arith.cmpi ne, %6, %c0_i32_6 : i32
    scf.if %7 {
      %c0_11 = arith.constant 0 : index
      %c0_12 = arith.constant 0 : index
      %14 = vector.load %arg7[%c0_11, %c0_12] : memref<256x128xf32, #tpu.memory_space<vmem>>, vector<256x128xf32>
      tpu.vector_store %arg7[%c0_11, %c0_12], %4 {strides = array<i32>} : memref<256x128xf32, #tpu.memory_space<vmem>>, vector<256x128xf32>,
    } else {
    }
    %c0_i32_7 = arith.constant 0 : i32
    %8 = arith.cmpi sgt, %arg1, %c0_i32_7 : i32
    %9 = arith.extui %8 : i1 to i32
    %c0_i32_8 = arith.constant 0 : i32
    %10 = arith.cmpi ne, %9, %c0_i32_8 : i32
    scf.if %10 {
      %c0_11 = arith.constant 0 : index
      %c0_12 = arith.constant 0 : index
      %14 = vector.load %arg7[%c0_11, %c0_12] : memref<256x128xf32, #tpu.memory_space<vmem>>, vector<256x128xf32>
      %15 = arith.addf %14, %4 : vector<256x128xf32>
      %c0_13 = arith.constant 0 : index
      %c0_14 = arith.constant 0 : index
      %16 = vector.load %arg7[%c0_13, %c0_14] : memref<256x128xf32, #tpu.memory_space<vmem>>, vector<256x128xf32>
      tpu.vector_store %arg7[%c0_13, %c0_14], %15 {strides = array<i32>} : memref<256x128xf32, #tpu.memory_space<vmem>>, vector<256x128xf32>,
    } else {
    }
    %c0_i32_9 = arith.constant 0 : i32
    %11 = arith.cmpi eq, %arg1, %c0_i32_9 : i32
    %12 = arith.extui %11 : i1 to i32
    %c0_i32_10 = arith.constant 0 : i32
    %13 = arith.cmpi ne, %12, %c0_i32_10 : i32
    scf.if %13 {
      %c0_11 = arith.constant 0 : index
      %c0_12 = arith.constant 0 : index
      %14 = vector.load %arg7[%c0_11, %c0_12] : memref<256x128xf32, #tpu.memory_space<vmem>>, vector<256x128xf32>
      %c0_13 = arith.constant 0 : index
      %c0_14 = arith.constant 0 : index
      %15 = vector.load %arg5[%c0_13, %c0_14] : memref<1x128xf32, #tpu.memory_space<vmem>>, vector<1x128xf32>
      %16 = vector.broadcast %15 : vector<1x128xf32> to vector<256x128xf32>
      %17 = arith.addf %14, %16 : vector<256x128xf32>
      %c0_15 = arith.constant 0 : index
      %c0_16 = arith.constant 0 : index
      %18 = vector.load %arg6[%c0_15, %c0_16] : memref<256x128xf32, #tpu.memory_space<vmem>>, vector<256x128xf32>
      tpu.vector_store %arg6[%c0_15, %c0_16], %17 {strides = array<i32>} : memref<256x128xf32, #tpu.memory_space<vmem>>, vector<256x128xf32>,
    } else {
    }
    return
  }
  func.func @transform_0(%arg0: i32, %arg1: i32) -> (i32, i32) {
    %c0_i32 = arith.constant 0 : i32
    return %arg0, %arg1 : i32, i32
  }
  func.func @transform_1(%arg0: i32, %arg1: i32) -> (i32, i32) {
    %c0_i32 = arith.constant 0 : i32
    %c0_i32_0 = arith.constant 0 : i32
    return %arg1, %c0_i32 : i32, i32
  }
  func.func @transform_2(%arg0: i32, %arg1: i32) -> (i32, i32) {
    %c0_i32 = arith.constant 0 : i32
    %c0_i32_0 = arith.constant 0 : i32
    %c0_i32_1 = arith.constant 0 : i32
    return %c0_i32, %c0_i32_0 : i32, i32
  }
  func.func @transform_3(%arg0: i32, %arg1: i32) -> (i32, i32) {
    %c0_i32 = arith.constant 0 : i32
    %c0_i32_0 = arith.constant 0 : i32
    %c0_i32_1 = arith.constant 0 : i32
    return %c0_i32, %c0_i32_0 : i32, i32
  }
  func.func @transform_4(%arg0: i32, %arg1: i32) -> (i32, i32) {
    %c0_i32 = arith.constant 0 : i32
    %c0_i32_0 = arith.constant 0 : i32
    return %arg0, %c0_i32 : i32, i32
  }
}

</mosaic_0001>

<llo_original>
// kernel: tpu_custom_call.1
$region0: #{tpu_custom_call.1}
  #allocation0 [shape = 'u32[]', space=smem, size = 0x4, offset = 0x4, fixed_abs, tag = 'smem constant byte address 0x4 - core index']
  #allocation1 [shape = 'u32[144,128]{1,0:T(1,128)}', space=vmem, size = 0x12000, scoped, tag = 'internal scratch']
  #allocation2 [shape = 'f32[256,128]{1,0:T(8,128)}', space=vmem, size = 0x20000, scoped, tag = 'scratch operand']
  %s0 = inlined_call_operand.hbm [shape: f32[256,256], index: 0, kind: input, shape index: {}]
  %s1 = inlined_call_operand.vmem [shape: f32[256,64], index: 1, kind: input, shape index: {}]
  %s2 = inlined_call_operand.vmem [shape: f32[64,128], index: 2, kind: input, shape index: {}]
  %s3 = inlined_call_operand.vmem [shape: f32[1,128], index: 3, kind: input, shape index: {}]
  %s4 = inlined_call_operand.hbm [shape: f32[256,128], index: 4, kind: output, shape index: {}]
  %s5 = sld [smem:[#allocation0]]
  $region42: #{tpu_custom_call.1} parent=0
    _
  %s7 = ssub.s32 1, %s5
  %s8 = scalar_select 0, %s7, %s5
  $region1: #{tpu_custom_call.1} parent=0
    #allocation3 [shape = 'u8[262144]{0}', space=vmem, size = 0x40000, scoped, tag = 'input window, operand 0, single buffered']
    #allocation4 [shape = 's32[1]{0}', space=sflag, size = 0x4, scoped, tag = 'scoped memory for tpu_custom_call.1']
    #allocation5 [shape = 's32[1]{0}', space=sflag, size = 0x4, scoped, tag = 'scoped memory for tpu_custom_call.1']
    #allocation6 [shape = 'u8[131072]{0}', space=vmem, size = 0x20000, scoped, tag = 'output window, operand 0, single buffered']
    %9 = vsyncpa [#allocation4], 0
    %10 = vsyncpa [#allocation5], 0
    // Predicated region
    $region2: #{tpu_custom_call.1} parent=1 // pred_check
      _
    $region3: #{tpu_custom_call.1} parent=1 // pred_check_branch
      %12 = sbr.rel (0) target = $region5
    $region4: #{tpu_custom_call.1} parent=1 // pred_region
      %s14 = ssub.s32 8192, 8192
      %15 = vsyncadd [#allocation4], %s14
      %s16 = sshll.u32 [#allocation3], 4
      %s17 = int_to_ptr.vmem [resolvable:$true] %s16
      %22 = dma.hbm_to_vmem [thread:$0]  %s0, 8192, %s17, [#allocation4], 256, 256, 16
    $region5: #{tpu_custom_call.1} parent=1 // pred_fallthru
      _
    // Predicated region
    $region6: #{tpu_custom_call.1} parent=1 // pred_check
      _
    $region7: #{tpu_custom_call.1} parent=1 // pred_check_branch
      %24 = sbr.rel (0) target = $region9
    $region8: #{tpu_custom_call.1} parent=1 // pred_region
      _
    $region9: #{tpu_custom_call.1} parent=1 // pred_fallthru
      _
    // Predicated region
    $region10: #{tpu_custom_call.1} parent=1 // pred_check
      _
    $region11: #{tpu_custom_call.1} parent=1 // pred_check_branch
      %26 = sbr.rel (0) target = $region13
    $region12: #{tpu_custom_call.1} parent=1 // pred_region
      _
    $region13: #{tpu_custom_call.1} parent=1 // pred_fallthru
      _
    // Predicated region
    $region14: #{tpu_custom_call.1} parent=1 // pred_check
      _
    $region15: #{tpu_custom_call.1} parent=1 // pred_check_branch
      %28 = sbr.rel (0) target = $region17
    $region16: #{tpu_custom_call.1} parent=1 // pred_region
      _
    $region17: #{tpu_custom_call.1} parent=1 // pred_fallthru
      _
    // Predicated region
    $region18: #{tpu_custom_call.1} parent=1 // pred_check
      _
    $region19: #{tpu_custom_call.1} parent=1 // pred_check_branch
      %30 = sbr.rel (0) target = $region21
    $region20: #{tpu_custom_call.1} parent=1 // pred_region
      %31 = dma.done [#allocation4], 8192
    $region21: #{tpu_custom_call.1} parent=1 // pred_fallthru
      _
    %v32 = vld [vmem:[%s1] sm:$0xff]
    %v33 = vld [vmem:[%s1 + $0x8] sm:$0xff]
    %v34 = vld [vmem:[%s1 + $0x10] sm:$0xff]
    %v35 = vld [vmem:[%s1 + $0x18] sm:$0xff]
    %v36 = vld [vmem:[%s1 + $0x20] sm:$0xff]
    %v37 = vld [vmem:[%s1 + $0x28] sm:$0xff]
    %v38 = vld [vmem:[%s1 + $0x30] sm:$0xff]
    %v39 = vld [vmem:[%s1 + $0x38] sm:$0xff]
    %v40 = vld [vmem:[%s1 + $0x40] sm:$0xff]
    %v41 = vld [vmem:[%s1 + $0x48] sm:$0xff]
    %v42 = vld [vmem:[%s1 + $0x50] sm:$0xff]
    %v43 = vld [vmem:[%s1 + $0x58] sm:$0xff]
    %v44 = vld [vmem:[%s1 + $0x60] sm:$0xff]
    %v45 = vld [vmem:[%s1 + $0x68] sm:$0xff]
    %v46 = vld [vmem:[%s1 + $0x70] sm:$0xff]
    %v47 = vld [vmem:[%s1 + $0x78] sm:$0xff]
    %v48 = vld [vmem:[%s1 + $0x80] sm:$0xff]
    %v49 = vld [vmem:[%s1 + $0x88] sm:$0xff]
    %v50 = vld [vmem:[%s1 + $0x90] sm:$0xff]
    %v51 = vld [vmem:[%s1 + $0x98] sm:$0xff]
    %v52 = vld [vmem:[%s1 + $0xa0] sm:$0xff]
    %v53 = vld [vmem:[%s1 + $0xa8] sm:$0xff]
    %v54 = vld [vmem:[%s1 + $0xb0] sm:$0xff]
    %v55 = vld [vmem:[%s1 + $0xb8] sm:$0xff]
    %v56 = vld [vmem:[%s1 + $0xc0] sm:$0xff]
    %v57 = vld [vmem:[%s1 + $0xc8] sm:$0xff]
    %v58 = vld [vmem:[%s1 + $0xd0] sm:$0xff]
    %v59 = vld [vmem:[%s1 + $0xd8] sm:$0xff]
    %v60 = vld [vmem:[%s1 + $0xe0] sm:$0xff]
    %v61 = vld [vmem:[%s1 + $0xe8] sm:$0xff]
    %v62 = vld [vmem:[%s1 + $0xf0] sm:$0xff]
    %v63 = vld [vmem:[%s1 + $0xf8] sm:$0xff]
    %v64 = vld [vmem:[%s2] sm:$0xff]
    %v65 = vld [vmem:[%s2 + $0x8] sm:$0xff]
    %v66 = vld [vmem:[%s2 + $0x10] sm:$0xff]
    %v67 = vld [vmem:[%s2 + $0x18] sm:$0xff]
    %v68 = vld [vmem:[%s2 + $0x20] sm:$0xff]
    %v69 = vld [vmem:[%s2 + $0x28] sm:$0xff]
    %v70 = vld [vmem:[%s2 + $0x30] sm:$0xff]
    %v71 = vld [vmem:[%s2 + $0x38] sm:$0xff]
    %vm72 = vcmask 523264
    %v74 = vsel %vm72, %v32, 0
    %v77 = vsel %vm72, %v33, 0
    %v80 = vsel %vm72, %v34, 0
    %v83 = vsel %vm72, %v35, 0
    %v86 = vsel %vm72, %v36, 0
    %v89 = vsel %vm72, %v37, 0
    %v92 = vsel %vm72, %v38, 0
    %v95 = vsel %vm72, %v39, 0
    %v98 = vsel %vm72, %v40, 0
    %v101 = vsel %vm72, %v41, 0
    %v104 = vsel %vm72, %v42, 0
    %v107 = vsel %vm72, %v43, 0
    %v110 = vsel %vm72, %v44, 0
    %v113 = vsel %vm72, %v45, 0
    %v116 = vsel %vm72, %v46, 0
    %v119 = vsel %vm72, %v47, 0
    %v122 = vsel %vm72, %v48, 0
    %v125 = vsel %vm72, %v49, 0
    %v128 = vsel %vm72, %v50, 0
    %v131 = vsel %vm72, %v51, 0
    %v134 = vsel %vm72, %v52, 0
    %v137 = vsel %vm72, %v53, 0
    %v140 = vsel %vm72, %v54, 0
    %v143 = vsel %vm72, %v55, 0
    %v146 = vsel %vm72, %v56, 0
    %v149 = vsel %vm72, %v57, 0
    %v152 = vsel %vm72, %v58, 0
    %v155 = vsel %vm72, %v59, 0
    %v158 = vsel %vm72, %v60, 0
    %v161 = vsel %vm72, %v61, 0
    %v164 = vsel %vm72, %v62, 0
    %v167 = vsel %vm72, %v63, 0
    %169 = vmatprep.subr.mxu0 0.0
    %170 = vmatpush1.msra.mxu0 %v64
    %171 = vmatprep.subr.mxu0 0.0
    %172 = vmatpush1.msra.mxu0 %v65
    %173 = vmatprep.subr.mxu0 0.0
    %174 = vmatpush1.msra.mxu0 %v66
    %175 = vmatprep.subr.mxu0 0.0
    %176 = vmatpush1.msra.mxu0 %v67
    %177 = vmatprep.subr.mxu0 0.0
    %178 = vmatpush1.msra.mxu0 %v68
    %179 = vmatprep.subr.mxu0 0.0
    %180 = vmatpush1.msra.mxu0 %v69
    %181 = vmatprep.subr.mxu0 0.0
    %182 = vmatpush1.msra.mxu0 %v70
    %183 = vmatprep.subr.mxu0 0.0
    %184 = vmatpush1.msra.mxu0 %v71
    %185 = vmatprep.subr.mxu0 0.0
    %186 = vmatpush1.msra.mxu0 0.0
    %187 = vmatprep.subr.mxu0 0.0
    %188 = vmatpush1.msra.mxu0 0.0
    %189 = vmatprep.subr.mxu0 0.0
    %190 = vmatpush1.msra.mxu0 0.0
    %191 = vmatprep.subr.mxu0 0.0
    %192 = vmatpush1.msra.mxu0 0.0
    %193 = vmatprep.subr.mxu0 0.0
    %194 = vmatpush1.msra.mxu0 0.0
    %195 = vmatprep.subr.mxu0 0.0
    %196 = vmatpush1.msra.mxu0 0.0
    %197 = vmatprep.subr.mxu0 0.0
    %198 = vmatpush1.msra.mxu0 0.0
    %199 = vmatprep.subr.mxu0 0.0
    %200 = vmatpush1.msra.mxu0 0.0
    %201 = vmatprep.subr.mxu0 0.0
    %202 = vmatpush1.msra.mxu0 0.0
    %203 = vmatprep.subr.mxu0 0.0
    %204 = vmatpush1.msra.mxu0 0.0
    %205 = vmatprep.subr.mxu0 0.0
    %206 = vmatpush1.msra.mxu0 0.0
    %207 = vmatprep.subr.mxu0 0.0
    %208 = vmatpush1.msra.mxu0 0.0
    %209 = vmatprep.subr.mxu0 0.0
    %210 = vmatpush1.msra.mxu0 0.0
    %211 = vmatprep.subr.mxu0 0.0
    %212 = vmatpush1.msra.mxu0 0.0
    %213 = vmatprep.subr.mxu0 0.0
    %214 = vmatpush1.msra.mxu0 0.0
    %215 = vmatprep.subr.mxu0 0.0
    %216 = vmatpush1.msra.mxu0 0.0
    %217 = vmatprep.subr.mxu0 0.0
    %218 = vmatpush1.msra.mxu0 0.0
    %219 = vmatprep.subr.mxu0 0.0
    %220 = vmatpush1.msra.mxu0 0.0
    %221 = vmatprep.subr.mxu0 0.0
    %222 = vmatpush1.msra.mxu0 0.0
    %223 = vmatprep.subr.mxu0 0.0
    %224 = vmatpush1.msra.mxu0 0.0
    %225 = vmatprep.subr.mxu0 0.0
    %226 = vmatpush1.msra.mxu0 0.0
    %227 = vmatprep.subr.mxu0 0.0
    %228 = vmatpush1.msra.mxu0 0.0
    %229 = vmatprep.subr.mxu0 0.0
    %230 = vmatpush1.msra.mxu0 0.0
    %231 = vmatprep.subr.mxu0 0.0
    %232 = vmatpush1.msra.mxu0 0.0
    %233 = vmatprep.mubr.f32.mxu0 0.0
    %234 = vmatmul.mubr.f32.gmra.mrb[0].mxu0 %v74
    %v235 = vpop.f32.mrb[0].mxu0
    %v236 = vadd.f32 0.0, %v235
    %v237 = vpop.f32.mrb[0].mxu0
    %238 = vmatprep.mubr.f32.mxu0 0.0
    %239 = vmatmul.mubr.f32.gmra.mrb[0].mxu0 %v77
    %v240 = vpop.f32.mrb[0].mxu0
    %v241 = vadd.f32 0.0, %v240
    %v242 = vpop.f32.mrb[0].mxu0
    %243 = vmatprep.mubr.f32.mxu0 0.0
    %244 = vmatmul.mubr.f32.gmra.mrb[0].mxu0 %v80
    %v245 = vpop.f32.mrb[0].mxu0
    %v246 = vadd.f32 0.0, %v245
    %v247 = vpop.f32.mrb[0].mxu0
    %248 = vmatprep.mubr.f32.mxu0 0.0
    %249 = vmatmul.mubr.f32.gmra.mrb[0].mxu0 %v83
    %v250 = vpop.f32.mrb[0].mxu0
    %v251 = vadd.f32 0.0, %v250
    %v252 = vpop.f32.mrb[0].mxu0
    %253 = vmatprep.mubr.f32.mxu0 0.0
    %254 = vmatmul.mubr.f32.gmra.mrb[0].mxu0 %v86
    %v255 = vpop.f32.mrb[0].mxu0
    %v256 = vadd.f32 0.0, %v255
    %v257 = vpop.f32.mrb[0].mxu0
    %258 = vmatprep.mubr.f32.mxu0 0.0
    %259 = vmatmul.mubr.f32.gmra.mrb[0].mxu0 %v89
    %v260 = vpop.f32.mrb[0].mxu0
    %v261 = vadd.f32 0.0, %v260
    %v262 = vpop.f32.mrb[0].mxu0
    %263 = vmatprep.mubr.f32.mxu0 0.0
    %264 = vmatmul.mubr.f32.gmra.mrb[0].mxu0 %v92
    %v265 = vpop.f32.mrb[0].mxu0
    %v266 = vadd.f32 0.0, %v265
    %v267 = vpop.f32.mrb[0].mxu0
    %268 = vmatprep.mubr.f32.mxu0 0.0
    %269 = vmatmul.mubr.f32.gmra.mrb[0].mxu0 %v95
    %v270 = vpop.f32.mrb[0].mxu0
    %v271 = vadd.f32 0.0, %v270
    %v272 = vpop.f32.mrb[0].mxu0
    %273 = vmatprep.mubr.f32.mxu0 0.0
    %274 = vmatmul.mubr.f32.gmra.mrb[0].mxu0 %v98
    %v275 = vpop.f32.mrb[0].mxu0
    %v276 = vadd.f32 0.0, %v275
    %v277 = vpop.f32.mrb[0].mxu0
    %278 = vmatprep.mubr.f32.mxu0 0.0
    %279 = vmatmul.mubr.f32.gmra.mrb[0].mxu0 %v101
    %v280 = vpop.f32.mrb[0].mxu0
    %v281 = vadd.f32 0.0, %v280
    %v282 = vpop.f32.mrb[0].mxu0
    %283 = vmatprep.mubr.f32.mxu0 0.0
    %284 = vmatmul.mubr.f32.gmra.mrb[0].mxu0 %v104
    %v285 = vpop.f32.mrb[0].mxu0
    %v286 = vadd.f32 0.0, %v285
    %v287 = vpop.f32.mrb[0].mxu0
    %288 = vmatprep.mubr.f32.mxu0 0.0
    %289 = vmatmul.mubr.f32.gmra.mrb[0].mxu0 %v107
    %v290 = vpop.f32.mrb[0].mxu0
    %v291 = vadd.f32 0.0, %v290
    %v292 = vpop.f32.mrb[0].mxu0
    %293 = vmatprep.mubr.f32.mxu0 0.0
    %294 = vmatmul.mubr.f32.gmra.mrb[0].mxu0 %v110
    %v295 = vpop.f32.mrb[0].mxu0
    %v296 = vadd.f32 0.0, %v295
    %v297 = vpop.f32.mrb[0].mxu0
    %298 = vmatprep.mubr.f32.mxu0 0.0
    %299 = vmatmul.mubr.f32.gmra.mrb[0].mxu0 %v113
    %v300 = vpop.f32.mrb[0].mxu0
    %v301 = vadd.f32 0.0, %v300
    %v302 = vpop.f32.mrb[0].mxu0
    %303 = vmatprep.mubr.f32.mxu0 0.0
    %304 = vmatmul.mubr.f32.gmra.mrb[0].mxu0 %v116
    %v305 = vpop.f32.mrb[0].mxu0
    %v306 = vadd.f32 0.0, %v305
    %v307 = vpop.f32.mrb[0].mxu0
    %308 = vmatprep.mubr.f32.mxu0 0.0
    %309 = vmatmul.mubr.f32.gmra.mrb[0].mxu0 %v119
    %v310 = vpop.f32.mrb[0].mxu0
    %v311 = vadd.f32 0.0, %v310
    %v312 = vpop.f32.mrb[0].mxu0
    %313 = vmatprep.mubr.f32.mxu0 0.0
    %314 = vmatmul.mubr.f32.gmra.mrb[0].mxu0 %v122
    %v315 = vpop.f32.mrb[0].mxu0
    %v316 = vadd.f32 0.0, %v315
    %v317 = vpop.f32.mrb[0].mxu0
    %318 = vmatprep.mubr.f32.mxu0 0.0
    %319 = vmatmul.mubr.f32.gmra.mrb[0].mxu0 %v125
    %v320 = vpop.f32.mrb[0].mxu0
    %v321 = vadd.f32 0.0, %v320
    %v322 = vpop.f32.mrb[0].mxu0
    %323 = vmatprep.mubr.f32.mxu0 0.0
    %324 = vmatmul.mubr.f32.gmra.mrb[0].mxu0 %v128
    %v325 = vpop.f32.mrb[0].mxu0
    %v326 = vadd.f32 0.0, %v325
    %v327 = vpop.f32.mrb[0].mxu0
    %328 = vmatprep.mubr.f32.mxu0 0.0
    %329 = vmatmul.mubr.f32.gmra.mrb[0].mxu0 %v131
    %v330 = vpop.f32.mrb[0].mxu0
    %v331 = vadd.f32 0.0, %v330
    %v332 = vpop.f32.mrb[0].mxu0
    %333 = vmatprep.mubr.f32.mxu0 0.0
    %334 = vmatmul.mubr.f32.gmra.mrb[0].mxu0 %v134
    %v335 = vpop.f32.mrb[0].mxu0
    %v336 = vadd.f32 0.0, %v335
    %v337 = vpop.f32.mrb[0].mxu0
    %338 = vmatprep.mubr.f32.mxu0 0.0
    %339 = vmatmul.mubr.f32.gmra.mrb[0].mxu0 %v137
    %v340 = vpop.f32.mrb[0].mxu0
    %v341 = vadd.f32 0.0, %v340
    %v342 = vpop.f32.mrb[0].mxu0
    %343 = vmatprep.mubr.f32.mxu0 0.0
    %344 = vmatmul.mubr.f32.gmra.mrb[0].mxu0 %v140
    %v345 = vpop.f32.mrb[0].mxu0
    %v346 = vadd.f32 0.0, %v345
    %v347 = vpop.f32.mrb[0].mxu0
    %348 = vmatprep.mubr.f32.mxu0 0.0
    %349 = vmatmul.mubr.f32.gmra.mrb[0].mxu0 %v143
    %v350 = vpop.f32.mrb[0].mxu0
    %v351 = vadd.f32 0.0, %v350
    %v352 = vpop.f32.mrb[0].mxu0
    %353 = vmatprep.mubr.f32.mxu0 0.0
    %354 = vmatmul.mubr.f32.gmra.mrb[0].mxu0 %v146
    %v355 = vpop.f32.mrb[0].mxu0
    %v356 = vadd.f32 0.0, %v355
    %v357 = vpop.f32.mrb[0].mxu0
    %358 = vmatprep.mubr.f32.mxu0 0.0
    %359 = vmatmul.mubr.f32.gmra.mrb[0].mxu0 %v149
    %v360 = vpop.f32.mrb[0].mxu0
    %v361 = vadd.f32 0.0, %v360
    %v362 = vpop.f32.mrb[0].mxu0
    %363 = vmatprep.mubr.f32.mxu0 0.0
    %364 = vmatmul.mubr.f32.gmra.mrb[0].mxu0 %v152
    %v365 = vpop.f32.mrb[0].mxu0
    %v366 = vadd.f32 0.0, %v365
    %v367 = vpop.f32.mrb[0].mxu0
    %368 = vmatprep.mubr.f32.mxu0 0.0
    %369 = vmatmul.mubr.f32.gmra.mrb[0].mxu0 %v155
    %v370 = vpop.f32.mrb[0].mxu0
    %v371 = vadd.f32 0.0, %v370
    %v372 = vpop.f32.mrb[0].mxu0
    %373 = vmatprep.mubr.f32.mxu0 0.0
    %374 = vmatmul.mubr.f32.gmra.mrb[0].mxu0 %v158
    %v375 = vpop.f32.mrb[0].mxu0
    %v376 = vadd.f32 0.0, %v375
    %v377 = vpop.f32.mrb[0].mxu0
    %378 = vmatprep.mubr.f32.mxu0 0.0
    %379 = vmatmul.mubr.f32.gmra.mrb[0].mxu0 %v161
    %v380 = vpop.f32.mrb[0].mxu0
    %v381 = vadd.f32 0.0, %v380
    %v382 = vpop.f32.mrb[0].mxu0
    %383 = vmatprep.mubr.f32.mxu0 0.0
    %384 = vmatmul.mubr.f32.gmra.mrb[0].mxu0 %v164
    %v385 = vpop.f32.mrb[0].mxu0
    %v386 = vadd.f32 0.0, %v385
    %v387 = vpop.f32.mrb[0].mxu0
    %388 = vmatprep.mubr.f32.mxu0 0.0
    %389 = vmatmul.mubr.f32.gmra.mrb[0].mxu0 %v167
    %v390 = vpop.f32.mrb[0].mxu0
    %v391 = vadd.f32 0.0, %v390
    %v392 = vpop.f32.mrb[0].mxu0
    %393 = vdwg.mxu0
    %v394 = vld [vmem:[#allocation3] sm:$0xff]
    %v395 = vld [vmem:[#allocation3 + $0x8] sm:$0xff]
    %v396 = vld [vmem:[#allocation3 + $0x10] sm:$0xff]
    %v397 = vld [vmem:[#allocation3 + $0x18] sm:$0xff]
    %v398 = vld [vmem:[#allocation3 + $0x20] sm:$0xff]
    %v399 = vld [vmem:[#allocation3 + $0x28] sm:$0xff]
    %v400 = vld [vmem:[#allocation3 + $0x30] sm:$0xff]
    %v401 = vld [vmem:[#allocation3 + $0x38] sm:$0xff]
    %v402 = vld [vmem:[#allocation3 + $0x40] sm:$0xff]
    %v403 = vld [vmem:[#allocation3 + $0x48] sm:$0xff]
    %v404 = vld [vmem:[#allocation3 + $0x50] sm:$0xff]
    %v405 = vld [vmem:[#allocation3 + $0x58] sm:$0xff]
    %v406 = vld [vmem:[#allocation3 + $0x60] sm:$0xff]
    %v407 = vld [vmem:[#allocation3 + $0x68] sm:$0xff]
    %v408 = vld [vmem:[#allocation3 + $0x70] sm:$0xff]
    %v409 = vld [vmem:[#allocation3 + $0x78] sm:$0xff]
    %v410 = vld [vmem:[#allocation3 + $0x80] sm:$0xff]
    %v411 = vld [vmem:[#allocation3 + $0x88] sm:$0xff]
    %v412 = vld [vmem:[#allocation3 + $0x90] sm:$0xff]
    %v413 = vld [vmem:[#allocation3 + $0x98] sm:$0xff]
    %v414 = vld [vmem:[#allocation3 + $0xa0] sm:$0xff]
    %v415 = vld [vmem:[#allocation3 + $0xa8] sm:$0xff]
    %v416 = vld [vmem:[#allocation3 + $0xb0] sm:$0xff]
    %v417 = vld [vmem:[#allocation3 + $0xb8] sm:$0xff]
    %v418 = vld [vmem:[#allocation3 + $0xc0] sm:$0xff]
    %v419 = vld [vmem:[#allocation3 + $0xc8] sm:$0xff]
    %v420 = vld [vmem:[#allocation3 + $0xd0] sm:$0xff]
    %v421 = vld [vmem:[#allocation3 + $0xd8] sm:$0xff]
    %v422 = vld [vmem:[#allocation3 + $0xe0] sm:$0xff]
    %v423 = vld [vmem:[#allocation3 + $0xe8] sm:$0xff]
    %v424 = vld [vmem:[#allocation3 + $0xf0] sm:$0xff]
    %v425 = vld [vmem:[#allocation3 + $0xf8] sm:$0xff]
    %v426 = vld [vmem:[#allocation3 + $0x100] sm:$0xff]
    %v427 = vld [vmem:[#allocation3 + $0x108] sm:$0xff]
    %v428 = vld [vmem:[#allocation3 + $0x110] sm:$0xff]
    %v429 = vld [vmem:[#allocation3 + $0x118] sm:$0xff]
    %v430 = vld [vmem:[#allocation3 + $0x120] sm:$0xff]
    %v431 = vld [vmem:[#allocation3 + $0x128] sm:$0xff]
    %v432 = vld [vmem:[#allocation3 + $0x130] sm:$0xff]
    %v433 = vld [vmem:[#allocation3 + $0x138] sm:$0xff]
    %v434 = vld [vmem:[#allocation3 + $0x140] sm:$0xff]
    %v435 = vld [vmem:[#allocation3 + $0x148] sm:$0xff]
    %v436 = vld [vmem:[#allocation3 + $0x150] sm:$0xff]
    %v437 = vld [vmem:[#allocation3 + $0x158] sm:$0xff]
    %v438 = vld [vmem:[#allocation3 + $0x160] sm:$0xff]
    %v439 = vld [vmem:[#allocation3 + $0x168] sm:$0xff]
    %v440 = vld [vmem:[#allocation3 + $0x170] sm:$0xff]
    %v441 = vld [vmem:[#allocation3 + $0x178] sm:$0xff]
    %v442 = vld [vmem:[#allocation3 + $0x180] sm:$0xff]
    %v443 = vld [vmem:[#allocation3 + $0x188] sm:$0xff]
    %v444 = vld [vmem:[#allocation3 + $0x190] sm:$0xff]
    %v445 = vld [vmem:[#allocation3 + $0x198] sm:$0xff]
    %v446 = vld [vmem:[#allocation3 + $0x1a0] sm:$0xff]
    %v447 = vld [vmem:[#allocation3 + $0x1a8] sm:$0xff]
    %v448 = vld [vmem:[#allocation3 + $0x1b0] sm:$0xff]
    %v449 = vld [vmem:[#allocation3 + $0x1b8] sm:$0xff]
    %v450 = vld [vmem:[#allocation3 + $0x1c0] sm:$0xff]
    %v451 = vld [vmem:[#allocation3 + $0x1c8] sm:$0xff]
    %v452 = vld [vmem:[#allocation3 + $0x1d0] sm:$0xff]
    %v453 = vld [vmem:[#allocation3 + $0x1d8] sm:$0xff]
    %v454 = vld [vmem:[#allocation3 + $0x1e0] sm:$0xff]
    %v455 = vld [vmem:[#allocation3 + $0x1e8] sm:$0xff]
    %v456 = vld [vmem:[#allocation3 + $0x1f0] sm:$0xff]
    %v457 = vld [vmem:[#allocation3 + $0x1f8] sm:$0xff]
    %458 = vmatprep.subr.mxu0 0.0
    %459 = vmatpush1.msra.mxu0 %v236
    %460 = vmatprep.subr.mxu0 0.0
    %461 = vmatpush1.msra.mxu0 %v241
    %462 = vmatprep.subr.mxu0 0.0
    %463 = vmatpush1.msra.mxu0 %v246
    %464 = vmatprep.subr.mxu0 0.0
    %465 = vmatpush1.msra.mxu0 %v251
    %466 = vmatprep.subr.mxu0 0.0
    %467 = vmatpush1.msra.mxu0 %v256
    %468 = vmatprep.subr.mxu0 0.0
    %469 = vmatpush1.msra.mxu0 %v261
    %470 = vmatprep.subr.mxu0 0.0
    %471 = vmatpush1.msra.mxu0 %v266
    %472 = vmatprep.subr.mxu0 0.0
    %473 = vmatpush1.msra.mxu0 %v271
    %474 = vmatprep.subr.mxu0 0.0
    %475 = vmatpush1.msra.mxu0 %v276
    %476 = vmatprep.subr.mxu0 0.0
    %477 = vmatpush1.msra.mxu0 %v281
    %478 = vmatprep.subr.mxu0 0.0
    %479 = vmatpush1.msra.mxu0 %v286
    %480 = vmatprep.subr.mxu0 0.0
    %481 = vmatpush1.msra.mxu0 %v291
    %482 = vmatprep.subr.mxu0 0.0
    %483 = vmatpush1.msra.mxu0 %v296
    %484 = vmatprep.subr.mxu0 0.0
    %485 = vmatpush1.msra.mxu0 %v301
    %486 = vmatprep.subr.mxu0 0.0
    %487 = vmatpush1.msra.mxu0 %v306
    %488 = vmatprep.subr.mxu0 0.0
    %489 = vmatpush1.msra.mxu0 %v311
    %490 = vmatprep.subr.mxu0 0.0
    %491 = vmatpush1.msra.mxu0 %v316
    %492 = vmatprep.subr.mxu0 0.0
    %493 = vmatpush1.msra.mxu0 %v321
    %494 = vmatprep.subr.mxu0 0.0
    %495 = vmatpush1.msra.mxu0 %v326
    %496 = vmatprep.subr.mxu0 0.0
    %497 = vmatpush1.msra.mxu0 %v331
    %498 = vmatprep.subr.mxu0 0.0
    %499 = vmatpush1.msra.mxu0 %v336
    %500 = vmatprep.subr.mxu0 0.0
    %501 = vmatpush1.msra.mxu0 %v341
    %502 = vmatprep.subr.mxu0 0.0
    %503 = vmatpush1.msra.mxu0 %v346
    %504 = vmatprep.subr.mxu0 0.0
    %505 = vmatpush1.msra.mxu0 %v351
    %506 = vmatprep.subr.mxu0 0.0
    %507 = vmatpush1.msra.mxu0 %v356
    %508 = vmatprep.subr.mxu0 0.0
    %509 = vmatpush1.msra.mxu0 %v361
    %510 = vmatprep.subr.mxu0 0.0
    %511 = vmatpush1.msra.mxu0 %v366
    %512 = vmatprep.subr.mxu0 0.0
    %513 = vmatpush1.msra.mxu0 %v371
    %514 = vmatprep.subr.mxu0 0.0
    %515 = vmatpush1.msra.mxu0 %v376
    %516 = vmatprep.subr.mxu0 0.0
    %517 = vmatpush1.msra.mxu0 %v381
    %518 = vmatprep.subr.mxu0 0.0
    %519 = vmatpush1.msra.mxu0 %v386
    %520 = vmatprep.subr.mxu0 0.0
    %521 = vmatpush1.msra.mxu0 %v391
    %522 = vmatprep.mubr.f32.mxu0 %v395
    %523 = vmatmul.mubr.f32.gmra.mrb[0].mxu0 %v394
    %v524 = vpop.f32.mrb[0].mxu0
    %v525 = vadd.f32 0.0, %v524
    %v526 = vpop.f32.mrb[0].mxu0
    %527 = vmatprep.mubr.f32.mxu0 %v397
    %528 = vmatmul.mubr.f32.gmra.mrb[0].mxu0 %v396
    %v529 = vpop.f32.mrb[0].mxu0
    %v530 = vadd.f32 0.0, %v529
    %v531 = vpop.f32.mrb[0].mxu0
    %532 = vmatprep.mubr.f32.mxu0 %v399
    %533 = vmatmul.mubr.f32.gmra.mrb[0].mxu0 %v398
    %v534 = vpop.f32.mrb[0].mxu0
    %v535 = vadd.f32 0.0, %v534
    %v536 = vpop.f32.mrb[0].mxu0
    %537 = vmatprep.mubr.f32.mxu0 %v401
    %538 = vmatmul.mubr.f32.gmra.mrb[0].mxu0 %v400
    %v539 = vpop.f32.mrb[0].mxu0
    %v540 = vadd.f32 0.0, %v539
    %v541 = vpop.f32.mrb[0].mxu0
    %542 = vmatprep.mubr.f32.mxu0 %v403
    %543 = vmatmul.mubr.f32.gmra.mrb[0].mxu0 %v402
    %v544 = vpop.f32.mrb[0].mxu0
    %v545 = vadd.f32 0.0, %v544
    %v546 = vpop.f32.mrb[0].mxu0
    %547 = vmatprep.mubr.f32.mxu0 %v405
    %548 = vmatmul.mubr.f32.gmra.mrb[0].mxu0 %v404
    %v549 = vpop.f32.mrb[0].mxu0
    %v550 = vadd.f32 0.0, %v549
    %v551 = vpop.f32.mrb[0].mxu0
    %552 = vmatprep.mubr.f32.mxu0 %v407
    %553 = vmatmul.mubr.f32.gmra.mrb[0].mxu0 %v406
    %v554 = vpop.f32.mrb[0].mxu0
    %v555 = vadd.f32 0.0, %v554
    %v556 = vpop.f32.mrb[0].mxu0
    %557 = vmatprep.mubr.f32.mxu0 %v409
    %558 = vmatmul.mubr.f32.gmra.mrb[0].mxu0 %v408
    %v559 = vpop.f32.mrb[0].mxu0
    %v560 = vadd.f32 0.0, %v559
    %v561 = vpop.f32.mrb[0].mxu0
    %562 = vmatprep.mubr.f32.mxu0 %v411
    %563 = vmatmul.mubr.f32.gmra.mrb[0].mxu0 %v410
    %v564 = vpop.f32.mrb[0].mxu0
    %v565 = vadd.f32 0.0, %v564
    %v566 = vpop.f32.mrb[0].mxu0
    %567 = vmatprep.mubr.f32.mxu0 %v413
    %568 = vmatmul.mubr.f32.gmra.mrb[0].mxu0 %v412
    %v569 = vpop.f32.mrb[0].mxu0
    %v570 = vadd.f32 0.0, %v569
    %v571 = vpop.f32.mrb[0].mxu0
    %572 = vmatprep.mubr.f32.mxu0 %v415
    %573 = vmatmul.mubr.f32.gmra.mrb[0].mxu0 %v414
    %v574 = vpop.f32.mrb[0].mxu0
    %v575 = vadd.f32 0.0, %v574
    %v576 = vpop.f32.mrb[0].mxu0
    %577 = vmatprep.mubr.f32.mxu0 %v417
    %578 = vmatmul.mubr.f32.gmra.mrb[0].mxu0 %v416
    %v579 = vpop.f32.mrb[0].mxu0
    %v580 = vadd.f32 0.0, %v579
    %v581 = vpop.f32.mrb[0].mxu0
    %582 = vmatprep.mubr.f32.mxu0 %v419
    %583 = vmatmul.mubr.f32.gmra.mrb[0].mxu0 %v418
    %v584 = vpop.f32.mrb[0].mxu0
    %v585 = vadd.f32 0.0, %v584
    %v586 = vpop.f32.mrb[0].mxu0
    %587 = vmatprep.mubr.f32.mxu0 %v421
    %588 = vmatmul.mubr.f32.gmra.mrb[0].mxu0 %v420
    %v589 = vpop.f32.mrb[0].mxu0
    %v590 = vadd.f32 0.0, %v589
    %v591 = vpop.f32.mrb[0].mxu0
    %592 = vmatprep.mubr.f32.mxu0 %v423
    %593 = vmatmul.mubr.f32.gmra.mrb[0].mxu0 %v422
    %v594 = vpop.f32.mrb[0].mxu0
    %v595 = vadd.f32 0.0, %v594
    %v596 = vpop.f32.mrb[0].mxu0
    %597 = vmatprep.mubr.f32.mxu0 %v425
    %598 = vmatmul.mubr.f32.gmra.mrb[0].mxu0 %v424
    %v599 = vpop.f32.mrb[0].mxu0
    %v600 = vadd.f32 0.0, %v599
    %v601 = vpop.f32.mrb[0].mxu0
    %602 = vmatprep.mubr.f32.mxu0 %v427
    %603 = vmatmul.mubr.f32.gmra.mrb[0].mxu0 %v426
    %v604 = vpop.f32.mrb[0].mxu0
    %v605 = vadd.f32 0.0, %v604
    %v606 = vpop.f32.mrb[0].mxu0
    %607 = vmatprep.mubr.f32.mxu0 %v429
    %608 = vmatmul.mubr.f32.gmra.mrb[0].mxu0 %v428
    %v609 = vpop.f32.mrb[0].mxu0
    %v610 = vadd.f32 0.0, %v609
    %v611 = vpop.f32.mrb[0].mxu0
    %612 = vmatprep.mubr.f32.mxu0 %v431
    %613 = vmatmul.mubr.f32.gmra.mrb[0].mxu0 %v430
    %v614 = vpop.f32.mrb[0].mxu0
    %v615 = vadd.f32 0.0, %v614
    %v616 = vpop.f32.mrb[0].mxu0
    %617 = vmatprep.mubr.f32.mxu0 %v433
    %618 = vmatmul.mubr.f32.gmra.mrb[0].mxu0 %v432
    %v619 = vpop.f32.mrb[0].mxu0
    %v620 = vadd.f32 0.0, %v619
    %v621 = vpop.f32.mrb[0].mxu0
    %622 = vmatprep.mubr.f32.mxu0 %v435
    %623 = vmatmul.mubr.f32.gmra.mrb[0].mxu0 %v434
    %v624 = vpop.f32.mrb[0].mxu0
    %v625 = vadd.f32 0.0, %v624
    %v626 = vpop.f32.mrb[0].mxu0
    %627 = vmatprep.mubr.f32.mxu0 %v437
    %628 = vmatmul.mubr.f32.gmra.mrb[0].mxu0 %v436
    %v629 = vpop.f32.mrb[0].mxu0
    %v630 = vadd.f32 0.0, %v629
    %v631 = vpop.f32.mrb[0].mxu0
    %632 = vmatprep.mubr.f32.mxu0 %v439
    %633 = vmatmul.mubr.f32.gmra.mrb[0].mxu0 %v438
    %v634 = vpop.f32.mrb[0].mxu0
    %v635 = vadd.f32 0.0, %v634
    %v636 = vpop.f32.mrb[0].mxu0
    %637 = vmatprep.mubr.f32.mxu0 %v441
    %638 = vmatmul.mubr.f32.gmra.mrb[0].mxu0 %v440
    %v639 = vpop.f32.mrb[0].mxu0
    %v640 = vadd.f32 0.0, %v639
    %v641 = vpop.f32.mrb[0].mxu0
    %642 = vmatprep.mubr.f32.mxu0 %v443
    %643 = vmatmul.mubr.f32.gmra.mrb[0].mxu0 %v442
    %v644 = vpop.f32.mrb[0].mxu0
    %v645 = vadd.f32 0.0, %v644
    %v646 = vpop.f32.mrb[0].mxu0
    %647 = vmatprep.mubr.f32.mxu0 %v445
    %648 = vmatmul.mubr.f32.gmra.mrb[0].mxu0 %v444
    %v649 = vpop.f32.mrb[0].mxu0
    %v650 = vadd.f32 0.0, %v649
    %v651 = vpop.f32.mrb[0].mxu0
    %652 = vmatprep.mubr.f32.mxu0 %v447
    %653 = vmatmul.mubr.f32.gmra.mrb[0].mxu0 %v446
    %v654 = vpop.f32.mrb[0].mxu0
    %v655 = vadd.f32 0.0, %v654
    %v656 = vpop.f32.mrb[0].mxu0
    %657 = vmatprep.mubr.f32.mxu0 %v449
    %658 = vmatmul.mubr.f32.gmra.mrb[0].mxu0 %v448
    %v659 = vpop.f32.mrb[0].mxu0
    %v660 = vadd.f32 0.0, %v659
    %v661 = vpop.f32.mrb[0].mxu0
    %662 = vmatprep.mubr.f32.mxu0 %v451
    %663 = vmatmul.mubr.f32.gmra.mrb[0].mxu0 %v450
    %v664 = vpop.f32.mrb[0].mxu0
    %v665 = vadd.f32 0.0, %v664
    %v666 = vpop.f32.mrb[0].mxu0
    %667 = vmatprep.mubr.f32.mxu0 %v453
    %668 = vmatmul.mubr.f32.gmra.mrb[0].mxu0 %v452
    %v669 = vpop.f32.mrb[0].mxu0
    %v670 = vadd.f32 0.0, %v669
    %v671 = vpop.f32.mrb[0].mxu0
    %672 = vmatprep.mubr.f32.mxu0 %v455
    %673 = vmatmul.mubr.f32.gmra.mrb[0].mxu0 %v454
    %v674 = vpop.f32.mrb[0].mxu0
    %v675 = vadd.f32 0.0, %v674
    %v676 = vpop.f32.mrb[0].mxu0
    %677 = vmatprep.mubr.f32.mxu0 %v457
    %678 = vmatmul.mubr.f32.gmra.mrb[0].mxu0 %v456
    %v679 = vpop.f32.mrb[0].mxu0
    %v680 = vadd.f32 0.0, %v679
    %v681 = vpop.f32.mrb[0].mxu0
    %682 = vdwg.mxu0
    %p683 = scmp.eq.s32.totalorder 0, 0
    // Predicated region
    $region22: #{tpu_custom_call.1} parent=1 // pred_check
      %p684 = pneg %p683
    $region23: #{tpu_custom_call.1} parent=1 // pred_check_branch
      %686 = sbr.rel (%p684) target = $region25
    $region24: #{tpu_custom_call.1} parent=1 // pred_region
      %687 = vst [vmem:[#allocation2] sm:$0xff] %v525
      %688 = vst [vmem:[#allocation2 + $0x8] sm:$0xff] %v530
      %689 = vst [vmem:[#allocation2 + $0x10] sm:$0xff] %v535
      %690 = vst [vmem:[#allocation2 + $0x18] sm:$0xff] %v540
      %691 = vst [vmem:[#allocation2 + $0x20] sm:$0xff] %v545
      %692 = vst [vmem:[#allocation2 + $0x28] sm:$0xff] %v550
      %693 = vst [vmem:[#allocation2 + $0x30] sm:$0xff] %v555
      %694 = vst [vmem:[#allocation2 + $0x38] sm:$0xff] %v560
      %695 = vst [vmem:[#allocation2 + $0x40] sm:$0xff] %v565
      %696 = vst [vmem:[#allocation2 + $0x48] sm:$0xff] %v570
      %697 = vst [vmem:[#allocation2 + $0x50] sm:$0xff] %v575
      %698 = vst [vmem:[#allocation2 + $0x58] sm:$0xff] %v580
      %699 = vst [vmem:[#allocation2 + $0x60] sm:$0xff] %v585
      %700 = vst [vmem:[#allocation2 + $0x68] sm:$0xff] %v590
      %701 = vst [vmem:[#allocation2 + $0x70] sm:$0xff] %v595
      %702 = vst [vmem:[#allocation2 + $0x78] sm:$0xff] %v600
      %703 = vst [vmem:[#allocation2 + $0x80] sm:$0xff] %v605
      %704 = vst [vmem:[#allocation2 + $0x88] sm:$0xff] %v610
      %705 = vst [vmem:[#allocation2 + $0x90] sm:$0xff] %v615
      %706 = vst [vmem:[#allocation2 + $0x98] sm:$0xff] %v620
      %707 = vst [vmem:[#allocation2 + $0xa0] sm:$0xff] %v625
      %708 = vst [vmem:[#allocation2 + $0xa8] sm:$0xff] %v630
      %709 = vst [vmem:[#allocation2 + $0xb0] sm:$0xff] %v635
      %710 = vst [vmem:[#allocation2 + $0xb8] sm:$0xff] %v640
      %711 = vst [vmem:[#allocation2 + $0xc0] sm:$0xff] %v645
      %712 = vst [vmem:[#allocation2 + $0xc8] sm:$0xff] %v650
      %713 = vst [vmem:[#allocation2 + $0xd0] sm:$0xff] %v655
      %714 = vst [vmem:[#allocation2 + $0xd8] sm:$0xff] %v660
      %715 = vst [vmem:[#allocation2 + $0xe0] sm:$0xff] %v665
      %716 = vst [vmem:[#allocation2 + $0xe8] sm:$0xff] %v670
      %717 = vst [vmem:[#allocation2 + $0xf0] sm:$0xff] %v675
      %718 = vst [vmem:[#allocation2 + $0xf8] sm:$0xff] %v680
    $region25: #{tpu_custom_call.1} parent=1 // pred_fallthru
      _
    %p719 = scmp.gt.s32.totalorder 0, 0
    // Predicated region
    $region26: #{tpu_custom_call.1} parent=1 // pred_check
      %p720 = pneg %p719
    $region27: #{tpu_custom_call.1} parent=1 // pred_check_branch
      %722 = sbr.rel (%p720) target = $region29
    $region28: #{tpu_custom_call.1} parent=1 // pred_region
      %v723 = vld [vmem:[#allocation2] sm:$0xff]
      %v724 = vld [vmem:[#allocation2 + $0x8] sm:$0xff]
      %v725 = vld [vmem:[#allocation2 + $0x10] sm:$0xff]
      %v726 = vld [vmem:[#allocation2 + $0x18] sm:$0xff]
      %v727 = vld [vmem:[#allocation2 + $0x20] sm:$0xff]
      %v728 = vld [vmem:[#allocation2 + $0x28] sm:$0xff]
      %v729 = vld [vmem:[#allocation2 + $0x30] sm:$0xff]
      %v730 = vld [vmem:[#allocation2 + $0x38] sm:$0xff]
      %v731 = vld [vmem:[#allocation2 + $0x40] sm:$0xff]
      %v732 = vld [vmem:[#allocation2 + $0x48] sm:$0xff]
      %v733 = vld [vmem:[#allocation2 + $0x50] sm:$0xff]
      %v734 = vld [vmem:[#allocation2 + $0x58] sm:$0xff]
      %v735 = vld [vmem:[#allocation2 + $0x60] sm:$0xff]
      %v736 = vld [vmem:[#allocation2 + $0x68] sm:$0xff]
      %v737 = vld [vmem:[#allocation2 + $0x70] sm:$0xff]
      %v738 = vld [vmem:[#allocation2 + $0x78] sm:$0xff]
      %v739 = vld [vmem:[#allocation2 + $0x80] sm:$0xff]
      %v740 = vld [vmem:[#allocation2 + $0x88] sm:$0xff]
      %v741 = vld [vmem:[#allocation2 + $0x90] sm:$0xff]
      %v742 = vld [vmem:[#allocation2 + $0x98] sm:$0xff]
      %v743 = vld [vmem:[#allocation2 + $0xa0] sm:$0xff]
      %v744 = vld [vmem:[#allocation2 + $0xa8] sm:$0xff]
      %v745 = vld [vmem:[#allocation2 + $0xb0] sm:$0xff]
      %v746 = vld [vmem:[#allocation2 + $0xb8] sm:$0xff]
      %v747 = vld [vmem:[#allocation2 + $0xc0] sm:$0xff]
      %v748 = vld [vmem:[#allocation2 + $0xc8] sm:$0xff]
      %v749 = vld [vmem:[#allocation2 + $0xd0] sm:$0xff]
      %v750 = vld [vmem:[#allocation2 + $0xd8] sm:$0xff]
      %v751 = vld [vmem:[#allocation2 + $0xe0] sm:$0xff]
      %v752 = vld [vmem:[#allocation2 + $0xe8] sm:$0xff]
      %v753 = vld [vmem:[#allocation2 + $0xf0] sm:$0xff]
      %v754 = vld [vmem:[#allocation2 + $0xf8] sm:$0xff]
      %v755 = vadd.f32 %v723, %v525
      %v756 = vadd.f32 %v724, %v530
      %v757 = vadd.f32 %v725, %v535
      %v758 = vadd.f32 %v726, %v540
      %v759 = vadd.f32 %v727, %v545
      %v760 = vadd.f32 %v728, %v550
      %v761 = vadd.f32 %v729, %v555
      %v762 = vadd.f32 %v730, %v560
      %v763 = vadd.f32 %v731, %v565
      %v764 = vadd.f32 %v732, %v570
      %v765 = vadd.f32 %v733, %v575
      %v766 = vadd.f32 %v734, %v580
      %v767 = vadd.f32 %v735, %v585
      %v768 = vadd.f32 %v736, %v590
      %v769 = vadd.f32 %v737, %v595
      %v770 = vadd.f32 %v738, %v600
      %v771 = vadd.f32 %v739, %v605
      %v772 = vadd.f32 %v740, %v610
      %v773 = vadd.f32 %v741, %v615
      %v774 = vadd.f32 %v742, %v620
      %v775 = vadd.f32 %v743, %v625
      %v776 = vadd.f32 %v744, %v630
      %v777 = vadd.f32 %v745, %v635
      %v778 = vadd.f32 %v746, %v640
      %v779 = vadd.f32 %v747, %v645
      %v780 = vadd.f32 %v748, %v650
      %v781 = vadd.f32 %v749, %v655
      %v782 = vadd.f32 %v750, %v660
      %v783 = vadd.f32 %v751, %v665
      %v784 = vadd.f32 %v752, %v670
      %v785 = vadd.f32 %v753, %v675
      %v786 = vadd.f32 %v754, %v680
      %787 = vst [vmem:[#allocation2] sm:$0xff] %v755
      %788 = vst [vmem:[#allocation2 + $0x8] sm:$0xff] %v756
      %789 = vst [vmem:[#allocation2 + $0x10] sm:$0xff] %v757
      %790 = vst [vmem:[#allocation2 + $0x18] sm:$0xff] %v758
      %791 = vst [vmem:[#allocation2 + $0x20] sm:$0xff] %v759
      %792 = vst [vmem:[#allocation2 + $0x28] sm:$0xff] %v760
      %793 = vst [vmem:[#allocation2 + $0x30] sm:$0xff] %v761
      %794 = vst [vmem:[#allocation2 + $0x38] sm:$0xff] %v762
      %795 = vst [vmem:[#allocation2 + $0x40] sm:$0xff] %v763
      %796 = vst [vmem:[#allocation2 + $0x48] sm:$0xff] %v764
      %797 = vst [vmem:[#allocation2 + $0x50] sm:$0xff] %v765
      %798 = vst [vmem:[#allocation2 + $0x58] sm:$0xff] %v766
      %799 = vst [vmem:[#allocation2 + $0x60] sm:$0xff] %v767
      %800 = vst [vmem:[#allocation2 + $0x68] sm:$0xff] %v768
      %801 = vst [vmem:[#allocation2 + $0x70] sm:$0xff] %v769
      %802 = vst [vmem:[#allocation2 + $0x78] sm:$0xff] %v770
      %803 = vst [vmem:[#allocation2 + $0x80] sm:$0xff] %v771
      %804 = vst [vmem:[#allocation2 + $0x88] sm:$0xff] %v772
      %805 = vst [vmem:[#allocation2 + $0x90] sm:$0xff] %v773
      %806 = vst [vmem:[#allocation2 + $0x98] sm:$0xff] %v774
      %807 = vst [vmem:[#allocation2 + $0xa0] sm:$0xff] %v775
      %808 = vst [vmem:[#allocation2 + $0xa8] sm:$0xff] %v776
      %809 = vst [vmem:[#allocation2 + $0xb0] sm:$0xff] %v777
      %810 = vst [vmem:[#allocation2 + $0xb8] sm:$0xff] %v778
      %811 = vst [vmem:[#allocation2 + $0xc0] sm:$0xff] %v779
      %812 = vst [vmem:[#allocation2 + $0xc8] sm:$0xff] %v780
      %813 = vst [vmem:[#allocation2 + $0xd0] sm:$0xff] %v781
      %814 = vst [vmem:[#allocation2 + $0xd8] sm:$0xff] %v782
      %815 = vst [vmem:[#allocation2 + $0xe0] sm:$0xff] %v783
      %816 = vst [vmem:[#allocation2 + $0xe8] sm:$0xff] %v784
      %817 = vst [vmem:[#allocation2 + $0xf0] sm:$0xff] %v785
      %818 = vst [vmem:[#allocation2 + $0xf8] sm:$0xff] %v786
    $region29: #{tpu_custom_call.1} parent=1 // pred_fallthru
      _
    // Predicated region
    $region30: #{tpu_custom_call.1} parent=1 // pred_check
      %p819 = pneg %p683
    $region31: #{tpu_custom_call.1} parent=1 // pred_check_branch
      %821 = sbr.rel (%p819) target = $region33
    $region32: #{tpu_custom_call.1} parent=1 // pred_region
      %v822 = vld [vmem:[#allocation2] sm:$0xff]
      %v823 = vld [vmem:[#allocation2 + $0x8] sm:$0xff]
      %v824 = vld [vmem:[#allocation2 + $0x10] sm:$0xff]
      %v825 = vld [vmem:[#allocation2 + $0x18] sm:$0xff]
      %v826 = vld [vmem:[#allocation2 + $0x20] sm:$0xff]
      %v827 = vld [vmem:[#allocation2 + $0x28] sm:$0xff]
      %v828 = vld [vmem:[#allocation2 + $0x30] sm:$0xff]
      %v829 = vld [vmem:[#allocation2 + $0x38] sm:$0xff]
      %v830 = vld [vmem:[#allocation2 + $0x40] sm:$0xff]
      %v831 = vld [vmem:[#allocation2 + $0x48] sm:$0xff]
      %v832 = vld [vmem:[#allocation2 + $0x50] sm:$0xff]
      %v833 = vld [vmem:[#allocation2 + $0x58] sm:$0xff]
      %v834 = vld [vmem:[#allocation2 + $0x60] sm:$0xff]
      %v835 = vld [vmem:[#allocation2 + $0x68] sm:$0xff]
      %v836 = vld [vmem:[#allocation2 + $0x70] sm:$0xff]
      %v837 = vld [vmem:[#allocation2 + $0x78] sm:$0xff]
      %v838 = vld [vmem:[#allocation2 + $0x80] sm:$0xff]
      %v839 = vld [vmem:[#allocation2 + $0x88] sm:$0xff]
      %v840 = vld [vmem:[#allocation2 + $0x90] sm:$0xff]
      %v841 = vld [vmem:[#allocation2 + $0x98] sm:$0xff]
      %v842 = vld [vmem:[#allocation2 + $0xa0] sm:$0xff]
      %v843 = vld [vmem:[#allocation2 + $0xa8] sm:$0xff]
      %v844 = vld [vmem:[#allocation2 + $0xb0] sm:$0xff]
      %v845 = vld [vmem:[#allocation2 + $0xb8] sm:$0xff]
      %v846 = vld [vmem:[#allocation2 + $0xc0] sm:$0xff]
      %v847 = vld [vmem:[#allocation2 + $0xc8] sm:$0xff]
      %v848 = vld [vmem:[#allocation2 + $0xd0] sm:$0xff]
      %v849 = vld [vmem:[#allocation2 + $0xd8] sm:$0xff]
      %v850 = vld [vmem:[#allocation2 + $0xe0] sm:$0xff]
      %v851 = vld [vmem:[#allocation2 + $0xe8] sm:$0xff]
      %v852 = vld [vmem:[#allocation2 + $0xf0] sm:$0xff]
      %v853 = vld [vmem:[#allocation2 + $0xf8] sm:$0xff]
      %v854 = vld [vmem:[%s3] sm:$0x1]
      %v856 = vlaneseq
      %v857 = vshrl.u32 %v856, 7
      %v858 = vsub.s32 0, %v857
      %v859 = vrot.slane %v854, %v858
      %v861 = vadd.f32 %v822, %v859
      %v862 = vadd.f32 %v823, %v859
      %v863 = vadd.f32 %v824, %v859
      %v864 = vadd.f32 %v825, %v859
      %v865 = vadd.f32 %v826, %v859
      %v866 = vadd.f32 %v827, %v859
      %v867 = vadd.f32 %v828, %v859
      %v868 = vadd.f32 %v829, %v859
      %v869 = vadd.f32 %v830, %v859
      %v870 = vadd.f32 %v831, %v859
      %v871 = vadd.f32 %v832, %v859
      %v872 = vadd.f32 %v833, %v859
      %v873 = vadd.f32 %v834, %v859
      %v874 = vadd.f32 %v835, %v859
      %v875 = vadd.f32 %v836, %v859
      %v876 = vadd.f32 %v837, %v859
      %v877 = vadd.f32 %v838, %v859
      %v878 = vadd.f32 %v839, %v859
      %v879 = vadd.f32 %v840, %v859
      %v880 = vadd.f32 %v841, %v859
      %v881 = vadd.f32 %v842, %v859
      %v882 = vadd.f32 %v843, %v859
      %v883 = vadd.f32 %v844, %v859
      %v884 = vadd.f32 %v845, %v859
      %v885 = vadd.f32 %v846, %v859
      %v886 = vadd.f32 %v847, %v859
      %v887 = vadd.f32 %v848, %v859
      %v888 = vadd.f32 %v849, %v859
      %v889 = vadd.f32 %v850, %v859
      %v890 = vadd.f32 %v851, %v859
      %v891 = vadd.f32 %v852, %v859
      %v892 = vadd.f32 %v853, %v859
      %893 = vst [vmem:[#allocation6] sm:$0xff] %v861
      %894 = vst [vmem:[#allocation6 + $0x8] sm:$0xff] %v862
      %895 = vst [vmem:[#allocation6 + $0x10] sm:$0xff] %v863
      %896 = vst [vmem:[#allocation6 + $0x18] sm:$0xff] %v864
      %897 = vst [vmem:[#allocation6 + $0x20] sm:$0xff] %v865
      %898 = vst [vmem:[#allocation6 + $0x28] sm:$0xff] %v866
      %899 = vst [vmem:[#allocation6 + $0x30] sm:$0xff] %v867
      %900 = vst [vmem:[#allocation6 + $0x38] sm:$0xff] %v868
      %901 = vst [vmem:[#allocation6 + $0x40] sm:$0xff] %v869
      %902 = vst [vmem:[#allocation6 + $0x48] sm:$0xff] %v870
      %903 = vst [vmem:[#allocation6 + $0x50] sm:$0xff] %v871
      %904 = vst [vmem:[#allocation6 + $0x58] sm:$0xff] %v872
      %905 = vst [vmem:[#allocation6 + $0x60] sm:$0xff] %v873
      %906 = vst [vmem:[#allocation6 + $0x68] sm:$0xff] %v874
      %907 = vst [vmem:[#allocation6 + $0x70] sm:$0xff] %v875
      %908 = vst [vmem:[#allocation6 + $0x78] sm:$0xff] %v876
      %909 = vst [vmem:[#allocation6 + $0x80] sm:$0xff] %v877
      %910 = vst [vmem:[#allocation6 + $0x88] sm:$0xff] %v878
      %911 = vst [vmem:[#allocation6 + $0x90] sm:$0xff] %v879
      %912 = vst [vmem:[#allocation6 + $0x98] sm:$0xff] %v880
      %913 = vst [vmem:[#allocation6 + $0xa0] sm:$0xff] %v881
      %914 = vst [vmem:[#allocation6 + $0xa8] sm:$0xff] %v882
      %915 = vst [vmem:[#allocation6 + $0xb0] sm:$0xff] %v883
      %916 = vst [vmem:[#allocation6 + $0xb8] sm:$0xff] %v884
      %917 = vst [vmem:[#allocation6 + $0xc0] sm:$0xff] %v885
      %918 = vst [vmem:[#allocation6 + $0xc8] sm:$0xff] %v886
      %919 = vst [vmem:[#allocation6 + $0xd0] sm:$0xff] %v887
      %920 = vst [vmem:[#allocation6 + $0xd8] sm:$0xff] %v888
      %921 = vst [vmem:[#allocation6 + $0xe0] sm:$0xff] %v889
      %922 = vst [vmem:[#allocation6 + $0xe8] sm:$0xff] %v890
      %923 = vst [vmem:[#allocation6 + $0xf0] sm:$0xff] %v891
      %924 = vst [vmem:[#allocation6 + $0xf8] sm:$0xff] %v892
    $region33: #{tpu_custom_call.1} parent=1 // pred_fallthru
      _
    // Predicated region
    $region34: #{tpu_custom_call.1} parent=1 // pred_check
      _
    $region35: #{tpu_custom_call.1} parent=1 // pred_check_branch
      %926 = sbr.rel (0) target = $region37
    $region36: #{tpu_custom_call.1} parent=1 // pred_region
      %s928 = ssub.s32 4096, 4096
      %929 = vsyncadd [#allocation5], %s928
      %s930 = sshll.u32 [#allocation6], 4
      %s931 = int_to_ptr.vmem [resolvable:$true] %s930
      %936 = dma.vmem_to_hbm [thread:$0]  %s931, 4096, %s4, [#allocation5], 128, 128, 8
    $region37: #{tpu_custom_call.1} parent=1 // pred_fallthru
      _
    // Predicated region
    $region38: #{tpu_custom_call.1} parent=1 // pred_check
      _
    $region39: #{tpu_custom_call.1} parent=1 // pred_check_branch
      %938 = sbr.rel (0) target = $region41
    $region40: #{tpu_custom_call.1} parent=1 // pred_region
      %939 = dma.done [#allocation5], 4096
    $region41: #{tpu_custom_call.1} parent=1 // pred_fallthru
      _
    %940 = vsyncpa [#allocation4], 1
    %941 = vsyncpa [#allocation5], 1

</llo_original>
